<compile_context>
chip_gen: v6e
topology: v6e:2x2x1
jax: 0.10.0
libtpu: 0.0.40
codegen_flags: <defaults>
</compile_context>

<pallas_src>
import jax
import jax.numpy as jnp
from jax.experimental import pallas as pl
from jax.experimental.pallas import tpu as pltpu


def _round_up(x, m):
    return ((x + m - 1) // m) * m


def _gemm_bias_relu_kernel(w_ref, x_ref, b_ref, o_ref):
    """One image per grid step (flipped orientation: M on lanes).

    w_ref: (Cout_pad, Kpad)    repacked weights, bf16 (resident in VMEM)
    x_ref: (1, Kpad, Mpad)     im2col'd activations, bf16
    b_ref: (Cout_pad, 1)       bias, f32
    o_ref: (1, Cout_pad, Mpad) lane-dense output block (f32)
    """
    # Single MXU matmul, f32 accumulate: (Cout_pad, Kpad) @ (Kpad, Mpad).
    acc = jnp.dot(w_ref[...], x_ref[0], preferred_element_type=jnp.float32)
    # Bias (broadcast along lanes) + ReLU epilogue in f32; one cast at store.
    out = jnp.maximum(acc + b_ref[...], 0.0)
    o_ref[0] = out.astype(o_ref.dtype)


def conv_layer_forward(x_nchw, weight, bias, *, k=3, stride=1):
    """x_nchw: (N, Cin, H, W); weight: (Cout, Cin, k, k); bias: (Cout,).

    Returns (N, Cout, Hout, Wout) == ReLU(Conv2d(padding=(k-1)//2, stride)).
    """
    pad = (k - 1) // 2
    N, Cin, H, W = x_nchw.shape
    Cout = weight.shape[0]
    Hout = (H + 2 * pad - k) // stride + 1
    Wout = (W + 2 * pad - k) // stride + 1
    M = Hout * Wout
    K = k * k * Cin

    Kpad = _round_up(K, 16)        # bf16 sublane pack -> aligned RHS rows
    Cout_pad = _round_up(Cout, 8)  # f32 sublane tile on the output
    Mpad = _round_up(M, 128)       # lane-dense output (no-op here: M=256)

    # ---- wrapper-side layout plumbing (stays in NCHW; no transposes) ----
    x_p = jnp.pad(
        x_nchw, ((0, 0), (0, 0), (pad, pad), (pad, pad))).astype(jnp.bfloat16)

    # im2col with K ordered (cin, kh, kw) to match weight.reshape(Cout, Cin*k*k).
    taps = []
    for kh in range(k):
        for kw in range(k):
            taps.append(
                x_p[:, :, kh:kh + (Hout - 1) * stride + 1:stride,
                          kw:kw + (Wout - 1) * stride + 1:stride])
    # (N, Cin, k*k, Hout, Wout) -> (N, K, M): M = lane axis (lane-dense).
    x_cols = jnp.stack(taps, axis=2).reshape(N, K, M)
    x_cols = jnp.pad(x_cols, ((0, 0), (0, Kpad - K), (0, Mpad - M)))

    # (Cout, Cin, k, k) -> (Cout, K); zero-pad Cout->Cout_pad, K->Kpad.
    w2d = weight.reshape(Cout, K).astype(jnp.bfloat16)
    w2d = jnp.pad(w2d, ((0, Cout_pad - Cout), (0, Kpad - K)))
    b2d = jnp.pad(bias.astype(jnp.float32),
                  (0, Cout_pad - Cout)).reshape(Cout_pad, 1)

    out_padded = pl.pallas_call(
        _gemm_bias_relu_kernel,
        out_shape=jax.ShapeDtypeStruct((N, Cout_pad, Mpad), jnp.float32),
        grid_spec=pltpu.PrefetchScalarGridSpec(
            num_scalar_prefetch=0,
            grid=(N,),
            in_specs=[
                pl.BlockSpec((Cout_pad, Kpad), lambda n: (0, 0)),   # weights: DMA once
                pl.BlockSpec((1, Kpad, Mpad), lambda n: (n, 0, 0)),
                pl.BlockSpec((Cout_pad, 1), lambda n: (0, 0)),      # bias: DMA once
            ],
            out_specs=pl.BlockSpec((1, Cout_pad, Mpad), lambda n: (n, 0, 0)),
        ),
        compiler_params=pltpu.CompilerParams(
            dimension_semantics=("parallel",)),          # v7x: one image per TC
    )(w2d, x_cols, b2d)

    # Drop sublane/lane padding (no-ops at these shapes); already NCHW order.
    out = out_padded[:, :Cout, :M].reshape(N, Cout, Hout, Wout)
    return out


if __name__ == "__main__":
    # Small, deterministic problem: N=2, Cin=4, Cout=8, H=W=16, k=3, stride=1.
    key = jax.random.PRNGKey(0)
    kx, kw, kb = jax.random.split(key, 3)

    N, Cin, Cout, H, W, k, stride = 2, 4, 8, 16, 16, 3, 1
    x = jax.random.normal(kx, (N, Cin, H, W), dtype=jnp.float32)
    weight = jax.random.normal(kw, (Cout, Cin, k, k), dtype=jnp.float32) * 0.1
    bias = jax.random.normal(kb, (Cout,), dtype=jnp.float32) * 0.1

    out = conv_layer_forward(x, weight, bias, k=k, stride=stride)
    out = jax.block_until_ready(out)

    # Reference: XLA conv (NCHW, 'same' padding) + bias + ReLU, in f32.
    ref = jax.lax.conv_general_dilated(
        x, weight, window_strides=(stride, stride),
        padding=((1, 1), (1, 1)),
        dimension_numbers=("NCHW", "OIHW", "NCHW"))
    ref = jnp.maximum(ref + bias.reshape(1, Cout, 1, 1), 0.0)

    assert out.shape == (N, Cout, H, W)
    # bf16 operands with f32 accumulation -> loosen tolerance vs pure-f32 ref.
    assert jnp.allclose(out, ref, atol=2e-2, rtol=2e-2)
    print("KERNEL_OK")
</pallas_src>

<mosaic_0001>
module attributes {stable_mosaic.version = 11 : i64} {
  func.func @_gemm_bias_relu_kernel(%arg0: i32, %arg1: memref<8x48xbf16, #tpu.memory_space<vmem>>, %arg2: memref<1x48x256xbf16, #tpu.memory_space<vmem>>, %arg3: memref<8x1xf32, #tpu.memory_space<vmem>>, %arg4: memref<1x8x256xf32, #tpu.memory_space<vmem>>) attributes {dimension_semantics = [#tpu.dimension_semantics<parallel>], iteration_bounds = array<i64: 2>, scalar_prefetch = 0 : i64, scratch_operands = 0 : i64, tpu.core_type = #tpu.core_type<tc>, window_params = [{pipeline_mode = #tpu.pipeline_mode<synchronous>, transform_indices = @transform_0, window_bounds = array<i64: 8, 48>}, {transform_indices = @transform_1, window_bounds = array<i64: 1, 48, 256>}, {pipeline_mode = #tpu.pipeline_mode<synchronous>, transform_indices = @transform_2, window_bounds = array<i64: 8, 1>}, {transform_indices = @transform_3, window_bounds = array<i64: 1, 8, 256>}]} {
    %c0 = arith.constant 0 : index
    %c0_0 = arith.constant 0 : index
    %0 = vector.load %arg1[%c0, %c0_0] : memref<8x48xbf16, #tpu.memory_space<vmem>>, vector<8x48xbf16>
    %c0_1 = arith.constant 0 : index
    %c0_2 = arith.constant 0 : index
    %c0_3 = arith.constant 0 : index
    %1 = vector.load %arg2[%c0_1, %c0_2, %c0_3] : memref<1x48x256xbf16, #tpu.memory_space<vmem>>, vector<1x48x256xbf16>
    %2 = vector.shape_cast %1 : vector<1x48x256xbf16> to vector<48x256xbf16>
    %cst = arith.constant dense<0.000000e+00> : vector<8x256xf32>
    %3 = tpu.matmul %0, %2, %cst {dimension_numbers = #tpu.dot_dimension_numbers<[1], [0], [0], [1], [0, 0, 1, 1], [], []>} : vector<8x48xbf16>, vector<48x256xbf16>, vector<8x256xf32> -> vector<8x256xf32>
    %c0_4 = arith.constant 0 : index
    %c0_5 = arith.constant 0 : index
    %4 = vector.load %arg3[%c0_4, %c0_5] : memref<8x1xf32, #tpu.memory_space<vmem>>, vector<8x1xf32>
    %5 = vector.broadcast %4 : vector<8x1xf32> to vector<8x256xf32>
    %6 = arith.addf %3, %5 : vector<8x256xf32>
    %cst_6 = arith.constant 0.000000e+00 : f32
    %7 = vector.broadcast %cst_6 : f32 to vector<8x256xf32>
    %8 = arith.maximumf %6, %7 : vector<8x256xf32>
    %c0_7 = arith.constant 0 : index
    %c0_8 = arith.constant 0 : index
    %c0_9 = arith.constant 0 : index
    %9 = vector.load %arg4[%c0_7, %c0_8, %c0_9] : memref<1x8x256xf32, #tpu.memory_space<vmem>>, vector<1x8x256xf32>
    %10 = vector.shape_cast %9 : vector<1x8x256xf32> to vector<8x256xf32>
    %11 = vector.shape_cast %8 : vector<8x256xf32> to vector<1x8x256xf32>
    tpu.vector_store %arg4[%c0_7, %c0_8, %c0_9], %11 {strides = array<i32>} : memref<1x8x256xf32, #tpu.memory_space<vmem>>, vector<1x8x256xf32>,
    return
  }
  func.func @transform_0(%arg0: i32) -> (i32, i32) {
    %c0_i32 = arith.constant 0 : i32
    %c0_i32_0 = arith.constant 0 : i32
    %c0_i32_1 = arith.constant 0 : i32
    return %c0_i32, %c0_i32_0 : i32, i32
  }
  func.func @transform_1(%arg0: i32) -> (i32, i32, i32) {
    %c0_i32 = arith.constant 0 : i32
    %c0_i32_0 = arith.constant 0 : i32
    %c0_i32_1 = arith.constant 0 : i32
    return %arg0, %c0_i32, %c0_i32_0 : i32, i32, i32
  }
  func.func @transform_2(%arg0: i32) -> (i32, i32) {
    %c0_i32 = arith.constant 0 : i32
    %c0_i32_0 = arith.constant 0 : i32
    %c0_i32_1 = arith.constant 0 : i32
    return %c0_i32, %c0_i32_0 : i32, i32
  }
  func.func @transform_3(%arg0: i32) -> (i32, i32, i32) {
    %c0_i32 = arith.constant 0 : i32
    %c0_i32_0 = arith.constant 0 : i32
    %c0_i32_1 = arith.constant 0 : i32
    return %arg0, %c0_i32, %c0_i32_0 : i32, i32, i32
  }
}

</mosaic_0001>

<llo_original>
// kernel: tpu_custom_call.1
$region0: #{tpu_custom_call.1}
  #allocation0 [shape = 'u32[]', space=smem, size = 0x4, offset = 0x4, fixed_abs, tag = 'smem constant byte address 0x4 - core index']
  #allocation1 [shape = 'u32[144,128]{1,0:T(1,128)}', space=vmem, size = 0x12000, scoped, tag = 'internal scratch']
  %s0 = inlined_call_operand.vmem [shape: bf16[8,48], index: 0, kind: input, shape index: {}]
  %s1 = inlined_call_operand.hbm [shape: bf16[2,48,256], index: 1, kind: input, shape index: {}]
  %s2 = inlined_call_operand.vmem [shape: f32[8,1], index: 2, kind: input, shape index: {}]
  %s3 = inlined_call_operand.hbm [shape: f32[2,8,256], index: 3, kind: output, shape index: {}]
  %s4 = sld [smem:[#allocation0]]
  $region49: #{tpu_custom_call.1} parent=0
    _
  %s6 = ssub.s32 1, %s4
  %s7 = scalar_select 0, %s6, %s4
  $region1: #{tpu_custom_call.1} parent=0
    #allocation2 [shape = 'u8[49152]{0}', space=vmem, size = 0xc000, scoped, tag = 'input window, operand 1']
    #allocation3 [shape = 's32[2]{0}', space=sflag, size = 0x8, scoped, tag = 'scoped memory for tpu_custom_call.1']
    #allocation4 [shape = 's32[2]{0}', space=sflag, size = 0x8, scoped, tag = 'scoped memory for tpu_custom_call.1']
    #allocation5 [shape = 'u8[16384]{0}', space=vmem, size = 0x4000, scoped, tag = 'output window, operand 0']
    %8 = vsyncpa [#allocation3], 0
    %s9 = scalar_lea.sflag [#allocation3], 1
    %10 = vsyncpa %s9, 0
    %11 = vsyncpa [#allocation4], 0
    %s12 = scalar_lea.sflag [#allocation4], 1
    %13 = vsyncpa %s12, 0
    loop: start=0, step=1, limit=4
    $region2: #{tpu_custom_call.1} parent=1 // loop_pre_header
      _
    $region3: #{tpu_custom_call.1} parent=1 // loop_header
      %s15 = sphi 0, %s19
      %p16 = scmp.ge.s32.totalorder %s15, 4
      %s23 = sphi 0, %s23
      %s25 = sphi 0, %s23
      %s26 = sphi 0, %s25
      %s40 = sphi 0, %s26
      %s46 = sphi 0, %s48
      %s49 = sphi 0, %s46
      %s50 = sphi 0, %s49
      %s66 = sphi 0, %s50
      %s70 = sphi 0, %s70
      %s72 = sphi 0, %s70
      %s73 = sphi 0, %s72
      %s87 = sphi 0, %s73
      %s93 = sphi 0, %s95
      %s96 = sphi 0, %s93
      %s97 = sphi 0, %s96
      %s113 = sphi 0, %s97
    $region4: #{tpu_custom_call.1} parent=1 // loop_header_branch
      %18 = sbr.rel (%p16) target = $region8
    $region5: #{tpu_custom_call.1} parent=1 // loop_body
      %s20 = ssub.s32 %s15, 1
      %s21 = ssub.s32 %s15, 2
      %s22 = sadd.s32 %s15, 1
      %s24 = sadd.s32 %s23, 1
      %p27 = scmp.eq.s32.totalorder %s15, 1
      %p28 = scmp.ne.s32.totalorder %s23, %s25
      %p29 = scmp.eq.s32.totalorder %s15, 0
      %p30 = por %p28, %p29
      %p31 = scmp.ne.s32.totalorder %s23, %s25
      %p32 = scmp.eq.s32.totalorder %s20, 1
      %p33 = por %p31, %p32
      %p34 = scmp.ne.s32.totalorder %s25, %s26
      %p35 = scmp.eq.s32.totalorder %s20, 0
      %p36 = por %p34, %p35
      %p37 = scmp.ne.s32.totalorder %s25, %s26
      %p38 = scmp.eq.s32.totalorder %s21, 1
      %p39 = por %p37, %p38
      %p41 = scmp.ne.s32.totalorder %s26, %s40
      %p42 = scmp.eq.s32.totalorder %s21, 0
      %p43 = por %p41, %p42
      %s44 = ssub.s32 %s15, %s22
      %p45 = scmp.eq.s32.totalorder %s44, 0
      %s47 = sadd.s32 %s46, 1
      %s48 = scalar_select %p45, %s46, %s47
      %p51 = pneg %p45
      %p52 = scmp.eq.s32.totalorder %s15, 1
      %p53 = por %p51, %p52
      %p54 = scmp.ne.s32.totalorder %s46, %s49
      %p55 = scmp.eq.s32.totalorder %s15, 0
      %p56 = por %p54, %p55
      %p57 = scmp.ne.s32.totalorder %s46, %s49
      %p58 = scmp.eq.s32.totalorder %s20, 1
      %p59 = por %p57, %p58
      %p60 = scmp.ne.s32.totalorder %s49, %s50
      %p61 = scmp.eq.s32.totalorder %s20, 0
      %p62 = por %p60, %p61
      %p63 = scmp.ne.s32.totalorder %s49, %s50
      %p64 = scmp.eq.s32.totalorder %s21, 1
      %p65 = por %p63, %p64
      %p67 = scmp.ne.s32.totalorder %s50, %s66
      %p68 = scmp.eq.s32.totalorder %s21, 0
      %p69 = por %p67, %p68
      %s71 = sadd.s32 %s70, 1
      %p74 = scmp.eq.s32.totalorder %s15, 1
      %p75 = scmp.ne.s32.totalorder %s70, %s72
      %p76 = scmp.eq.s32.totalorder %s15, 0
      %p77 = por %p75, %p76
      %p78 = scmp.ne.s32.totalorder %s70, %s72
      %p79 = scmp.eq.s32.totalorder %s20, 1
      %p80 = por %p78, %p79
      %p81 = scmp.ne.s32.totalorder %s72, %s73
      %p82 = scmp.eq.s32.totalorder %s20, 0
      %p83 = por %p81, %p82
      %p84 = scmp.ne.s32.totalorder %s72, %s73
      %p85 = scmp.eq.s32.totalorder %s21, 1
      %p86 = por %p84, %p85
      %p88 = scmp.ne.s32.totalorder %s73, %s87
      %p89 = scmp.eq.s32.totalorder %s21, 0
      %p90 = por %p88, %p89
      %s91 = ssub.s32 %s15, %s22
      %p92 = scmp.eq.s32.totalorder %s91, 0
      %s94 = sadd.s32 %s93, 1
      %s95 = scalar_select %p92, %s93, %s94
      %p98 = pneg %p92
      %p99 = scmp.eq.s32.totalorder %s15, 1
      %p100 = por %p98, %p99
      %p101 = scmp.ne.s32.totalorder %s93, %s96
      %p102 = scmp.eq.s32.totalorder %s15, 0
      %p103 = por %p101, %p102
      %p104 = scmp.ne.s32.totalorder %s93, %s96
      %p105 = scmp.eq.s32.totalorder %s20, 1
      %p106 = por %p104, %p105
      %p107 = scmp.ne.s32.totalorder %s96, %s97
      %p108 = scmp.eq.s32.totalorder %s20, 0
      %p109 = por %p107, %p108
      %p110 = scmp.ne.s32.totalorder %s96, %s97
      %p111 = scmp.eq.s32.totalorder %s21, 1
      %p112 = por %p110, %p111
      %p114 = scmp.ne.s32.totalorder %s97, %s113
      %p115 = scmp.eq.s32.totalorder %s21, 0
      %p116 = por %p114, %p115
      %p117 = scmp.le.s32.totalorder 1, %s15
      %p118 = scmp.lt.s32.totalorder %s15, 3
      %p119 = pnand %p117, %p118
      %p120 = pneg %p119
      // Predicated region
      $region9: #{tpu_custom_call.1} parent=5 // pred_check
        _
      $region10: #{tpu_custom_call.1} parent=5 // pred_check_branch
        %122 = sbr.rel (%p119) target = $region12
      $region11: #{tpu_custom_call.1} parent=5 // pred_region
        %s123 = ssub.s32 %s15, 1
        // Predicated region
        $region13: #{tpu_custom_call.1} parent=11 // pred_check
          %p124 = pneg %p36
        $region14: #{tpu_custom_call.1} parent=11 // pred_check_branch
          %126 = sbr.rel (%p124) target = $region16
        $region15: #{tpu_custom_call.1} parent=11 // pred_region
          _
        $region16: #{tpu_custom_call.1} parent=11 // pred_fallthru
          _
        // Predicated region
        $region17: #{tpu_custom_call.1} parent=11 // pred_check
          %p127 = pneg %p83
        $region18: #{tpu_custom_call.1} parent=11 // pred_check_branch
          %129 = sbr.rel (%p127) target = $region20
        $region19: #{tpu_custom_call.1} parent=11 // pred_region
          _
        $region20: #{tpu_custom_call.1} parent=11 // pred_fallthru
          _
      $region12: #{tpu_custom_call.1} parent=5 // pred_fallthru
        _
      %p130 = scmp.lt.s32.totalorder %s15, 2
      // Predicated region
      $region21: #{tpu_custom_call.1} parent=5 // pred_check
        %p131 = pneg %p130
      $region22: #{tpu_custom_call.1} parent=5 // pred_check_branch
        %133 = sbr.rel (%p131) target = $region24
      $region23: #{tpu_custom_call.1} parent=5 // pred_region
        // Predicated region
        $region25: #{tpu_custom_call.1} parent=23 // pred_check
          %p134 = pneg %p56
        $region26: #{tpu_custom_call.1} parent=23 // pred_check_branch
          %136 = sbr.rel (%p134) target = $region28
        $region27: #{tpu_custom_call.1} parent=23 // pred_region
          %s137 = sand.u32 %s46, 1
          %s138 = scalar_lea.sflag [#allocation3], %s137
          %s139 = sand.u32 %s46, 1
          %s140 = smul.addr %s139, 48
          %s141 = scalar_lea.vmem [#allocation2], %s140
          %s143 = ssub.s32 768, 768
          %144 = vsyncadd %s138, %s143
          %s145 = smul.addr %s15, 12
          %s146 = smul.addr %s145, 64
          %s147 = scalar_lea.hbm %s1, %s146
          %s148 = sshll.u32 %s141, 4
          %s149 = int_to_ptr.vmem [resolvable:$true] %s148
          %154 = dma.hbm_to_vmem [thread:$0]  %s147, 768, %s149, %s138, 128, 128, 8
        $region28: #{tpu_custom_call.1} parent=23 // pred_fallthru
          _
      $region24: #{tpu_custom_call.1} parent=5 // pred_fallthru
        _
      %p155 = scmp.le.s32.totalorder 1, %s15
      %p156 = scmp.lt.s32.totalorder %s15, 3
      %p157 = pnand %p155, %p156
      %p158 = pneg %p157
      // Predicated region
      $region29: #{tpu_custom_call.1} parent=5 // pred_check
        _
      $region30: #{tpu_custom_call.1} parent=5 // pred_check_branch
        %160 = sbr.rel (%p157) target = $region32
      $region31: #{tpu_custom_call.1} parent=5 // pred_region
        %s161 = ssub.s32 %s15, 1
        %s162 = sand.u32 %s49, 1
        %s163 = scalar_lea.sflag [#allocation3], %s162
        %s164 = sand.u32 %s49, 1
        %s165 = smul.addr %s164, 48
        %s166 = scalar_lea.vmem [#allocation2], %s165
        // Predicated region
        $region33: #{tpu_custom_call.1} parent=31 // pred_check
          %p167 = pneg %p62
        $region34: #{tpu_custom_call.1} parent=31 // pred_check_branch
          %169 = sbr.rel (%p167) target = $region36
        $region35: #{tpu_custom_call.1} parent=31 // pred_region
          %170 = dma.done %s163, 768
        $region36: #{tpu_custom_call.1} parent=31 // pred_fallthru
          _
        %p171 = pneg %p36
        %p172 = pneg %p33
        %s173 = sand.u32 %s49, 1
        %s174 = scalar_lea.sflag [#allocation3], %s173
        %s175 = sand.u32 %s49, 1
        %s176 = smul.addr %s175, 48
        %s177 = scalar_lea.vmem [#allocation2], %s176
        %p178 = pneg %p62
        %p179 = pneg %p59
        %p180 = pneg %p83
        %p181 = pneg %p80
        %p182 = pneg %p109
        %p183 = pneg %p106
        %s184 = sand.u32 %s96, 1
        %s185 = scalar_lea.sflag [#allocation4], %s184
        %s186 = sand.u32 %s96, 1
        %s187 = smul.addr %s186, 16
        %s188 = scalar_lea.vmem [#allocation5], %s187
        %v190 = vld [vmem:[%s0] sm:$0xf]
        %v191 = vld [vmem:[%s166] sm:$0xff]
        %v192 = vld [vmem:[%s166 + $0x8] sm:$0xff]
        %v193 = vld [vmem:[%s166 + $0x10] sm:$0xff]
        %v194 = vld [vmem:[%s166 + $0x18] sm:$0xff]
        %v195 = vld [vmem:[%s166 + $0x20] sm:$0xff]
        %v196 = vld [vmem:[%s166 + $0x28] sm:$0xff]
        %v197 = vld [vmem:[%s2] sm:$0xff]
        %199 = vset.pattern.permute.xlu0 0
        %200 = vperm.xlu0 %199, %v197
        %v201 = vpop.permute.xlu0 %200
        %v209 = vunpack.c.l.b16 %v191
        %v210 = vunpack.c.h.b16 %v191
        %v211 = vunpack.c.l.b16 %v192
        %v212 = vunpack.c.h.b16 %v192
        %v213 = vunpack.c.l.b16 %v193
        %v214 = vunpack.c.h.b16 %v193
        %v215 = vunpack.c.l.b16 %v194
        %v216 = vunpack.c.h.b16 %v194
        %v217 = vunpack.c.l.b16 %v195
        %v218 = vunpack.c.h.b16 %v195
        %v219 = vunpack.c.l.b16 %v196
        %v220 = vunpack.c.h.b16 %v196
        %v221 = vpack.c.b16 %v211, %v209
        %v222 = vpack.c.b16 %v212, %v210
        %v223 = vpack.c.b16 %v215, %v213
        %v224 = vpack.c.b16 %v216, %v214
        %v225 = vpack.c.b16 %v219, %v217
        %v226 = vpack.c.b16 %v220, %v218
        %vm233 = vcmask 392192
        %v235 = vsel %vm233, %v190, 0
        %237 = vmatprep.subr.bf16.mxu0 0
        %238 = vmatpush1.bf16.msra.mxu0 0
        %239 = vmatprep.subr.bf16.mxu0 0
        %240 = vmatpush1.bf16.msra.mxu0 0
        %241 = vmatprep.subr.bf16.mxu0 0
        %242 = vmatpush1.bf16.msra.mxu0 0
        %243 = vmatprep.subr.bf16.mxu0 0
        %244 = vmatpush1.bf16.msra.mxu0 0
        %245 = vmatprep.subr.bf16.mxu0 0
        %246 = vmatpush1.bf16.msra.mxu0 0
        %247 = vmatprep.subr.bf16.mxu0 %v226
        %248 = vmatpush1.bf16.msra.mxu0 %v225
        %249 = vmatprep.subr.bf16.mxu0 %v224
        %250 = vmatpush1.bf16.msra.mxu0 %v223
        %251 = vmatprep.subr.bf16.mxu0 %v222
        %252 = vmatpush1.bf16.msra.mxu0 %v221
        %253 = vmatprep.subr.bf16.mxu0 0
        %254 = vmatpush2.bf16.msra.mxu0 0
        %255 = vmatprep.subr.bf16.mxu0 0
        %256 = vmatpush2.bf16.msra.mxu0 0
        %257 = vmatprep.subr.bf16.mxu0 0
        %258 = vmatpush2.bf16.msra.mxu0 0
        %259 = vmatprep.subr.bf16.mxu0 0
        %260 = vmatpush2.bf16.msra.mxu0 0
        %261 = vmatprep.subr.bf16.mxu0 0
        %262 = vmatpush2.bf16.msra.mxu0 0
        %263 = vmatprep.subr.bf16.mxu0 0
        %264 = vmatpush2.bf16.msra.mxu0 0
        %265 = vmatprep.subr.bf16.mxu0 0
        %266 = vmatpush2.bf16.msra.mxu0 0
        %267 = vmatprep.subr.bf16.mxu0 0
        %268 = vmatpush2.bf16.msra.mxu0 0
        %269 = vmatprep.mubr.bf16.mxu0 0
        %270 = vmatmul.mubr.bf16.gmra.mxu0 %v235
        %v271 = vpop.f32.mrf.mxu0
        %v272 = vadd.f32 %v201, %v271
        %v273 = vpop.f32.mrf.mxu0
        %v274 = vadd.f32 %v201, %v273
        %v275 = vpop.f32.mrf.mxu0
        %v276 = vpop.f32.mrf.mxu0
        %277 = vdwg.mxu0
        %v278 = vmax.f32 %v272, 0.0
        %v279 = vmax.f32 %v274, 0.0
        %280 = vst [vmem:[%s188] sm:$0xff] %v278
        %281 = vst [vmem:[%s188 + $0x8] sm:$0xff] %v279
        %s282 = sand.u32 %s96, 1
        %s283 = scalar_lea.sflag [#allocation4], %s282
        %s284 = sand.u32 %s96, 1
        %s285 = smul.addr %s284, 16
        %s286 = scalar_lea.vmem [#allocation5], %s285
        // Predicated region
        $region37: #{tpu_custom_call.1} parent=31 // pred_check
          %p287 = pneg %p106
        $region38: #{tpu_custom_call.1} parent=31 // pred_check_branch
          %289 = sbr.rel (%p287) target = $region40
        $region39: #{tpu_custom_call.1} parent=31 // pred_region
          %s291 = ssub.s32 256, 256
          %292 = vsyncadd %s283, %s291
          %s293 = smul.addr %s20, 2
          %s294 = smul.addr %s293, 128
          %s295 = scalar_lea.hbm %s3, %s294
          %s297 = sshll.u32 %s286, 4
          %s298 = int_to_ptr.vmem [resolvable:$true] %s297
          %300 = dma.vmem_to_hbm [thread:$0]  %s298, 256, %s295, %s283
        $region40: #{tpu_custom_call.1} parent=31 // pred_fallthru
          _
      $region32: #{tpu_custom_call.1} parent=5 // pred_fallthru
        _
      %p301 = scmp.le.s32.totalorder 2, %s15
      // Predicated region
      $region41: #{tpu_custom_call.1} parent=5 // pred_check
        %p302 = pneg %p301
      $region42: #{tpu_custom_call.1} parent=5 // pred_check_branch
        %304 = sbr.rel (%p302) target = $region44
      $region43: #{tpu_custom_call.1} parent=5 // pred_region
        %s305 = ssub.s32 %s15, 2
        // Predicated region
        $region45: #{tpu_custom_call.1} parent=43 // pred_check
          %p306 = pneg %p112
        $region46: #{tpu_custom_call.1} parent=43 // pred_check_branch
          %308 = sbr.rel (%p306) target = $region48
        $region47: #{tpu_custom_call.1} parent=43 // pred_region
          %s309 = sand.u32 %s97, 1
          %s310 = scalar_lea.sflag [#allocation4], %s309
          %s311 = sand.u32 %s97, 1
          %s312 = smul.addr %s311, 16
          %s313 = scalar_lea.vmem [#allocation5], %s312
          %314 = dma.done %s310, 256
        $region48: #{tpu_custom_call.1} parent=43 // pred_fallthru
          _
      $region44: #{tpu_custom_call.1} parent=5 // pred_fallthru
        _
    $region6: #{tpu_custom_call.1} parent=1 // loop_footer
      %s19 = sadd.s32 1, %s15
    $region7: #{tpu_custom_call.1} parent=1 // loop_footer_branch
      %14 = sbr.rel target = $region3
    $region8: #{tpu_custom_call.1} parent=1 // loop_exit
      _
    %315 = vsyncpa [#allocation3], 1
    %s316 = scalar_lea.sflag [#allocation3], 1
    %317 = vsyncpa %s316, 1
    %318 = vsyncpa [#allocation4], 1
    %s319 = scalar_lea.sflag [#allocation4], 1
    %320 = vsyncpa %s319, 1

</llo_original>
